<compile_context>
chip_gen: v5e
topology: v5e:2x2
jax: 0.10.0
libtpu: 0.0.40
codegen_flags: <defaults>
</compile_context>

<pallas_src>
import jax
import jax.numpy as jnp
from jax.experimental import pallas as pl
from jax.experimental.pallas import tpu as pltpu

_LANE = 128
_SUBLANE = 16          # bf16 activation packing -> batch tile multiple of 16


def _round_up(n, m):
    return ((n + m - 1) // m) * m


def _cdiv(a, b):
    return (a + b - 1) // b


def _gru_kernel(x_ref, h_ref, h_blend_ref, wih_ref, whh_ref,
                b_rz_ref, b_in_ref, b_hn_ref, out_ref):
    tn = out_ref.shape[1]                    # hidden-column tile width (static)

    x = x_ref[...]                           # (TB, I)   compute dtype (bf16)
    h = h_ref[...]                           # (TB, Hp)  compute dtype (bf16)

    # Two MXU matmuls over the full K, N = 3*tn lane-dense, f32 accumulation.
    gi = jnp.dot(x, wih_ref[...], preferred_element_type=jnp.float32)  # (TB, 3tn)
    gh = jnp.dot(h, whh_ref[...], preferred_element_type=jnp.float32)  # (TB, 3tn)

    # r and z gates: biases pre-folded (f32). sigmoid via a single tanh EUP push.
    rz_pre = gi[:, :2 * tn] + gh[:, :2 * tn] + b_rz_ref[...]
    rz = 0.5 * (jnp.tanh(0.5 * rz_pre) + 1.0)
    r = rz[:, :tn]
    z = rz[:, tn:]

    # n gate: r multiplies only the hidden-side pre-activation (+ its bias).
    i_n = gi[:, 2 * tn:] + b_in_ref[...]
    h_n = gh[:, 2 * tn:] + b_hn_ref[...]
    n = jnp.tanh(i_n + r * h_n)

    # Blend in f32 with the original-precision h tile: h' = n + z*(h - n).
    h_blend = h_blend_ref[...].astype(jnp.float32)
    out_ref[...] = (n + z * (h_blend - n)).astype(out_ref.dtype)


def prepare_gru_params(w_ih, w_hh, b_ih, b_hh, *,
                       compute_dtype=jnp.bfloat16, block_h=None):
    """One-time parameter prep.

    Splits per gate, pads H to Hp = n_h * tn (tn a multiple of 128), transposes
    to (K, 3*Hp) slabs whose columns are grouped per hidden-column tile as
    [r_j | z_j | n_j], and casts weights to `compute_dtype`. Biases stay f32;
    the r/z biases are pre-folded. Call once at parameter-load time."""
    three_h, input_size = w_ih.shape
    H = three_h // 3
    Hp0 = _round_up(H, _LANE)
    itemsize = jnp.dtype(compute_dtype).itemsize

    # Choose hidden-column tile width tn and number of column tiles n_h.
    if block_h is not None:
        tn_target = max(_LANE, _round_up(block_h, _LANE))
    else:
        resident = (input_size + Hp0) * 3 * Hp0 * itemsize   # resident slab bytes
        if resident <= 24 * 1024 * 1024:
            tn_target = Hp0                                   # fully resident
        else:
            budget = 6 * 1024 * 1024                          # per-block streamed bytes
            tn_target = max(
                _LANE,
                (budget // ((input_size + Hp0) * 3 * itemsize)) // _LANE * _LANE)
    n_h = max(1, _cdiv(Hp0, tn_target))
    tn = _round_up(_cdiv(Hp0, n_h), _LANE)
    Hp = n_h * tn
    pad_h = Hp - H

    f32 = jnp.float32
    # (3H, I) -> (3, Hp, I) -> (I, n_h, 3, tn) -> (I, 3*Hp)
    w_ih_g = jnp.pad(w_ih.astype(f32).reshape(3, H, input_size),
                     ((0, 0), (0, pad_h), (0, 0)))
    w_ih_all = jnp.transpose(w_ih_g.reshape(3, n_h, tn, input_size),
                             (3, 1, 0, 2)).reshape(input_size, 3 * Hp)
    # (3H, H) -> (3, Hp, Hp) -> (Hp, n_h, 3, tn) -> (Hp, 3*Hp)
    w_hh_g = jnp.pad(w_hh.astype(f32).reshape(3, H, H),
                     ((0, 0), (0, pad_h), (0, pad_h)))
    w_hh_all = jnp.transpose(w_hh_g.reshape(3, n_h, tn, Hp),
                             (3, 1, 0, 2)).reshape(Hp, 3 * Hp)

    b_ih_g = jnp.pad(b_ih.astype(f32).reshape(3, H), ((0, 0), (0, pad_h)))
    b_hh_g = jnp.pad(b_hh.astype(f32).reshape(3, H), ((0, 0), (0, pad_h)))
    # Folded r/z biases, interleaved per column tile -> block (1, 2*tn) at j.
    b_rz = jnp.transpose((b_ih_g[:2] + b_hh_g[:2]).reshape(2, n_h, tn),
                         (1, 0, 2)).reshape(1, 2 * Hp)
    b_in = b_ih_g[2].reshape(1, Hp)
    b_hn = b_hh_g[2].reshape(1, Hp)

    return dict(w_ih_all=w_ih_all.astype(compute_dtype),
                w_hh_all=w_hh_all.astype(compute_dtype),
                b_rz=b_rz, b_in=b_in, b_hn=b_hn,
                H=H, Hp=Hp, I=input_size, tn=tn, n_h=n_h,
                compute_dtype=jnp.dtype(compute_dtype))


def gru_cell_pallas(x, h, params, *, block_b=256):
    """x: (B, I); h: (B, H); params from prepare_gru_params. Returns (B, H)."""
    B, I = x.shape
    H, Hp, tn, n_h = params["H"], params["Hp"], params["tn"], params["n_h"]
    assert I == params["I"] and h.shape == (B, H)
    assert x.dtype == h.dtype, "x and h must share a dtype"
    out_dtype = x.dtype
    cdtype = params["compute_dtype"]

    # Hidden padding to lane-dense Hp (exact zeros, sliced off at the end).
    h_p = jnp.pad(h, ((0, 0), (0, Hp - H))) if Hp > H else h

    # Balanced batch tiles, multiple of 16 sublanes (bf16 packing).
    n_b = max(1, _cdiv(B, block_b))
    tb = _round_up(_cdiv(B, n_b), _SUBLANE)
    Bp = n_b * tb

    x_c = x.astype(cdtype)
    h_c = h_p.astype(cdtype)
    if Bp > B:
        pad = ((0, Bp - B), (0, 0))
        x_c = jnp.pad(x_c, pad)
        h_c = jnp.pad(h_c, pad)
        h_p = jnp.pad(h_p, pad)

    # VMEM footprint -> explicit limit (instead of default scoped limit).
    csz = jnp.dtype(cdtype).itemsize
    osz = jnp.dtype(out_dtype).itemsize
    hsz = jnp.dtype(h_p.dtype).itemsize
    wbuf = 1 if n_h == 1 else 2                       # resident vs streamed slabs
    vmem_bytes = (wbuf * ((I + Hp) * 3 * tn * csz + 4 * tn * 4)
                  + 2 * tb * (I + Hp) * csz           # x, h (double-buffered)
                  + 2 * tb * tn * (hsz + osz))        # blend tile + output tile
    vmem_limit = int(min(vmem_bytes + (16 << 20), 128 << 20))

    grid = (n_b, n_h)

    def _run(single_buffer_consts):
        # Grid-invariant operands -> single-buffered (no point double-buffering
        # data that never changes); when the hidden dim is column-tiled the
        # weight blocks change per step, so keep the default double buffer.
        const_mode = (pl.Buffered(1)
                      if (single_buffer_consts and n_h == 1) else None)

        def cspec(shape, imap):
            if const_mode is not None:
                return pl.BlockSpec(shape, imap, pipeline_mode=const_mode)
            return pl.BlockSpec(shape, imap)

        return pl.pallas_call(
            _gru_kernel,
            out_shape=jax.ShapeDtypeStruct((Bp, Hp), out_dtype),
            grid=grid,
            in_specs=[
                # Activations (full K rows, resident across the column axis).
                pl.BlockSpec((tb, I), lambda i, j: (i, 0)),
                pl.BlockSpec((tb, Hp), lambda i, j: (i, 0)),
                # Original-precision h tile for the blend term.
                pl.BlockSpec((tb, tn), lambda i, j: (i, j)),
                # Weight slabs / biases, one hidden-column tile [r_j|z_j|n_j].
                cspec((I, 3 * tn), lambda i, j: (0, j)),
                cspec((Hp, 3 * tn), lambda i, j: (0, j)),
                cspec((1, 2 * tn), lambda i, j: (0, j)),
                cspec((1, tn), lambda i, j: (0, j)),
                cspec((1, tn), lambda i, j: (0, j)),
            ],
            out_specs=pl.BlockSpec((tb, tn), lambda i, j: (i, j)),
            compiler_params=pltpu.CompilerParams(
                dimension_semantics=("parallel", "parallel"),
                vmem_limit_bytes=vmem_limit,
            ),
        )(x_c, h_c, h_p, params["w_ih_all"], params["w_hh_all"],
          params["b_rz"], params["b_in"], params["b_hn"])

    try:
        out = _run(True)
    except Exception:
        # Fallback for jax versions without BlockSpec pipeline_mode support.
        out = _run(False)

    return out[:B, :H]


def gru_cell_ref(x, h, w_ih, w_hh, b_ih, b_hh):
    """Pure-JAX reference mirroring torch.nn.GRUCell."""
    H = h.shape[1]
    gi = x @ w_ih.T + b_ih
    gh = h @ w_hh.T + b_hh
    i_r, i_z, i_n = gi[:, :H], gi[:, H:2 * H], gi[:, 2 * H:]
    h_r, h_z, h_n = gh[:, :H], gh[:, H:2 * H], gh[:, 2 * H:]
    r = jax.nn.sigmoid(i_r + h_r)
    z = jax.nn.sigmoid(i_z + h_z)
    n = jnp.tanh(i_n + r * h_n)
    return (1.0 - z) * n + z * h


# TODO(synk): the reference module's `else` branch (passing a tuple to GRUCell
# and unpacking (h, c)) is dead/invalid PyTorch; only the single-cell-step path
# is implemented. If this cell is later driven by a per-timestep scan, fuse the
# time loop into the kernel (sequential grid axis + h carried in VMEM scratch +
# input_output_aliases) so weights are read from HBM once per sequence.

if __name__ == "__main__":
    batch, input_size, hidden_size = 8, 32, 32

    key = jax.random.PRNGKey(0)
    kx, kh, k1, k2, k3, k4 = jax.random.split(key, 6)

    # Deterministic init matching nn.GRUCell: U(-1/sqrt(H), 1/sqrt(H)).
    bound = 1.0 / jnp.sqrt(jnp.float32(hidden_size))
    w_ih = jax.random.uniform(k1, (3 * hidden_size, input_size), jnp.float32, -bound, bound)
    w_hh = jax.random.uniform(k2, (3 * hidden_size, hidden_size), jnp.float32, -bound, bound)
    b_ih = jax.random.uniform(k3, (3 * hidden_size,), jnp.float32, -bound, bound)
    b_hh = jax.random.uniform(k4, (3 * hidden_size,), jnp.float32, -bound, bound)

    x = jax.random.normal(kx, (batch, input_size), jnp.float32)
    h = jax.random.normal(kh, (batch, hidden_size), jnp.float32)

    ref = gru_cell_ref(x, h, w_ih, w_hh, b_ih, b_hh)

    # f32 path (tight check of the kernel math / layout).
    params_f32 = prepare_gru_params(w_ih, w_hh, b_ih, b_hh, compute_dtype=jnp.float32)
    out_f32 = gru_cell_pallas(x, h, params_f32)
    jax.block_until_ready(out_f32)
    assert out_f32.shape == (batch, hidden_size)
    assert jnp.allclose(out_f32, ref, atol=1e-5, rtol=1e-5), "f32 mismatch vs reference"

    # bf16 weights/activations (default perf path), f32 accumulation + epilogue.
    params_bf16 = prepare_gru_params(w_ih, w_hh, b_ih, b_hh)
    out_bf16 = gru_cell_pallas(x, h, params_bf16)
    jax.block_until_ready(out_bf16)
    assert out_bf16.shape == (batch, hidden_size)
    assert jnp.allclose(out_bf16, ref, atol=5e-2, rtol=5e-2), "bf16 mismatch vs reference"

    print("KERNEL_OK")
</pallas_src>

<mosaic_0001>
module attributes {stable_mosaic.version = 11 : i64} {
  func.func @_gru_kernel(%arg0: i32, %arg1: i32, %arg2: memref<16x32xf32, #tpu.memory_space<vmem>>, %arg3: memref<16x128xf32, #tpu.memory_space<vmem>>, %arg4: memref<16x128xf32, #tpu.memory_space<vmem>>, %arg5: memref<32x384xf32, #tpu.memory_space<vmem>>, %arg6: memref<128x384xf32, #tpu.memory_space<vmem>>, %arg7: memref<1x256xf32, #tpu.memory_space<vmem>>, %arg8: memref<1x128xf32, #tpu.memory_space<vmem>>, %arg9: memref<1x128xf32, #tpu.memory_space<vmem>>, %arg10: memref<16x128xf32, #tpu.memory_space<vmem>>) attributes {dimension_semantics = [#tpu.dimension_semantics<parallel>, #tpu.dimension_semantics<parallel>], iteration_bounds = array<i64: 1, 1>, scalar_prefetch = 0 : i64, scratch_operands = 0 : i64, tpu.core_type = #tpu.core_type<tc>, window_params = [{transform_indices = @transform_0, window_bounds = array<i64: 16, 32>}, {transform_indices = @transform_1, window_bounds = array<i64: 16, 128>}, {transform_indices = @transform_2, window_bounds = array<i64: 16, 128>}, {pipeline_mode = #tpu.pipeline_mode<synchronous>, transform_indices = @transform_3, window_bounds = array<i64: 32, 384>}, {pipeline_mode = #tpu.pipeline_mode<synchronous>, transform_indices = @transform_4, window_bounds = array<i64: 128, 384>}, {pipeline_mode = #tpu.pipeline_mode<synchronous>, transform_indices = @transform_5, window_bounds = array<i64: 1, 256>}, {pipeline_mode = #tpu.pipeline_mode<synchronous>, transform_indices = @transform_6, window_bounds = array<i64: 1, 128>}, {pipeline_mode = #tpu.pipeline_mode<synchronous>, transform_indices = @transform_7, window_bounds = array<i64: 1, 128>}, {transform_indices = @transform_8, window_bounds = array<i64: 16, 128>}]} {
    %c0 = arith.constant 0 : index
    %c0_0 = arith.constant 0 : index
    %0 = vector.load %arg2[%c0, %c0_0] : memref<16x32xf32, #tpu.memory_space<vmem>>, vector<16x32xf32>
    %c0_1 = arith.constant 0 : index
    %c0_2 = arith.constant 0 : index
    %1 = vector.load %arg3[%c0_1, %c0_2] : memref<16x128xf32, #tpu.memory_space<vmem>>, vector<16x128xf32>
    %c0_3 = arith.constant 0 : index
    %c0_4 = arith.constant 0 : index
    %2 = vector.load %arg5[%c0_3, %c0_4] : memref<32x384xf32, #tpu.memory_space<vmem>>, vector<32x384xf32>
    %cst = arith.constant dense<0.000000e+00> : vector<16x384xf32>
    %3 = tpu.matmul %0, %2, %cst {dimension_numbers = #tpu.dot_dimension_numbers<[1], [0], [0], [1], [0, 0, 1, 1], [], []>} : vector<16x32xf32>, vector<32x384xf32>, vector<16x384xf32> -> vector<16x384xf32>
    %c0_5 = arith.constant 0 : index
    %c0_6 = arith.constant 0 : index
    %4 = vector.load %arg6[%c0_5, %c0_6] : memref<128x384xf32, #tpu.memory_space<vmem>>, vector<128x384xf32>
    %cst_7 = arith.constant dense<0.000000e+00> : vector<16x384xf32>
    %5 = tpu.matmul %1, %4, %cst_7 {dimension_numbers = #tpu.dot_dimension_numbers<[1], [0], [0], [1], [0, 0, 1, 1], [], []>} : vector<16x128xf32>, vector<128x384xf32>, vector<16x384xf32> -> vector<16x384xf32>
    %6 = vector.extract_strided_slice %3 {offsets = [0, 0], sizes = [16, 256], strides = [1, 1]} : vector<16x384xf32> to vector<16x256xf32>
    %7 = vector.extract_strided_slice %5 {offsets = [0, 0], sizes = [16, 256], strides = [1, 1]} : vector<16x384xf32> to vector<16x256xf32>
    %8 = arith.addf %6, %7 : vector<16x256xf32>
    %c0_8 = arith.constant 0 : index
    %c0_9 = arith.constant 0 : index
    %9 = vector.load %arg7[%c0_8, %c0_9] : memref<1x256xf32, #tpu.memory_space<vmem>>, vector<1x256xf32>
    %10 = vector.broadcast %9 : vector<1x256xf32> to vector<16x256xf32>
    %11 = arith.addf %8, %10 : vector<16x256xf32>
    %cst_10 = arith.constant 5.000000e-01 : f32
    %12 = vector.broadcast %cst_10 : f32 to vector<16x256xf32>
    %13 = arith.mulf %12, %11 : vector<16x256xf32>
    %14 = math.tanh %13 : vector<16x256xf32>
    %cst_11 = arith.constant 1.000000e+00 : f32
    %15 = vector.broadcast %cst_11 : f32 to vector<16x256xf32>
    %16 = arith.addf %14, %15 : vector<16x256xf32>
    %cst_12 = arith.constant 5.000000e-01 : f32
    %17 = vector.broadcast %cst_12 : f32 to vector<16x256xf32>
    %18 = arith.mulf %17, %16 : vector<16x256xf32>
    %19 = vector.extract_strided_slice %18 {offsets = [0, 0], sizes = [16, 128], strides = [1, 1]} : vector<16x256xf32> to vector<16x128xf32>
    %20 = vector.extract_strided_slice %18 {offsets = [0, 128], sizes = [16, 128], strides = [1, 1]} : vector<16x256xf32> to vector<16x128xf32>
    %21 = vector.extract_strided_slice %3 {offsets = [0, 256], sizes = [16, 128], strides = [1, 1]} : vector<16x384xf32> to vector<16x128xf32>
    %c0_13 = arith.constant 0 : index
    %c0_14 = arith.constant 0 : index
    %22 = vector.load %arg8[%c0_13, %c0_14] : memref<1x128xf32, #tpu.memory_space<vmem>>, vector<1x128xf32>
    %23 = vector.broadcast %22 : vector<1x128xf32> to vector<16x128xf32>
    %24 = arith.addf %21, %23 : vector<16x128xf32>
    %25 = vector.extract_strided_slice %5 {offsets = [0, 256], sizes = [16, 128], strides = [1, 1]} : vector<16x384xf32> to vector<16x128xf32>
    %c0_15 = arith.constant 0 : index
    %c0_16 = arith.constant 0 : index
    %26 = vector.load %arg9[%c0_15, %c0_16] : memref<1x128xf32, #tpu.memory_space<vmem>>, vector<1x128xf32>
    %27 = vector.broadcast %26 : vector<1x128xf32> to vector<16x128xf32>
    %28 = arith.addf %25, %27 : vector<16x128xf32>
    %29 = arith.mulf %19, %28 : vector<16x128xf32>
    %30 = arith.addf %24, %29 : vector<16x128xf32>
    %31 = math.tanh %30 : vector<16x128xf32>
    %c0_17 = arith.constant 0 : index
    %c0_18 = arith.constant 0 : index
    %32 = vector.load %arg4[%c0_17, %c0_18] : memref<16x128xf32, #tpu.memory_space<vmem>>, vector<16x128xf32>
    %33 = arith.subf %32, %31 : vector<16x128xf32>
    %34 = arith.mulf %20, %33 : vector<16x128xf32>
    %35 = arith.addf %31, %34 : vector<16x128xf32>
    %c0_19 = arith.constant 0 : index
    %c0_20 = arith.constant 0 : index
    %36 = vector.load %arg10[%c0_19, %c0_20] : memref<16x128xf32, #tpu.memory_space<vmem>>, vector<16x128xf32>
    tpu.vector_store %arg10[%c0_19, %c0_20], %35 {strides = array<i32>} : memref<16x128xf32, #tpu.memory_space<vmem>>, vector<16x128xf32>,
    return
  }
  func.func @transform_0(%arg0: i32, %arg1: i32) -> (i32, i32) {
    %c0_i32 = arith.constant 0 : i32
    %c0_i32_0 = arith.constant 0 : i32
    return %arg0, %c0_i32 : i32, i32
  }
  func.func @transform_1(%arg0: i32, %arg1: i32) -> (i32, i32) {
    %c0_i32 = arith.constant 0 : i32
    %c0_i32_0 = arith.constant 0 : i32
    return %arg0, %c0_i32 : i32, i32
  }
  func.func @transform_2(%arg0: i32, %arg1: i32) -> (i32, i32) {
    %c0_i32 = arith.constant 0 : i32
    return %arg0, %arg1 : i32, i32
  }
  func.func @transform_3(%arg0: i32, %arg1: i32) -> (i32, i32) {
    %c0_i32 = arith.constant 0 : i32
    %c0_i32_0 = arith.constant 0 : i32
    return %c0_i32, %arg1 : i32, i32
  }
  func.func @transform_4(%arg0: i32, %arg1: i32) -> (i32, i32) {
    %c0_i32 = arith.constant 0 : i32
    %c0_i32_0 = arith.constant 0 : i32
    return %c0_i32, %arg1 : i32, i32
  }
  func.func @transform_5(%arg0: i32, %arg1: i32) -> (i32, i32) {
    %c0_i32 = arith.constant 0 : i32
    %c0_i32_0 = arith.constant 0 : i32
    return %c0_i32, %arg1 : i32, i32
  }
  func.func @transform_6(%arg0: i32, %arg1: i32) -> (i32, i32) {
    %c0_i32 = arith.constant 0 : i32
    %c0_i32_0 = arith.constant 0 : i32
    return %c0_i32, %arg1 : i32, i32
  }
  func.func @transform_7(%arg0: i32, %arg1: i32) -> (i32, i32) {
    %c0_i32 = arith.constant 0 : i32
    %c0_i32_0 = arith.constant 0 : i32
    return %c0_i32, %arg1 : i32, i32
  }
  func.func @transform_8(%arg0: i32, %arg1: i32) -> (i32, i32) {
    %c0_i32 = arith.constant 0 : i32
    return %arg0, %arg1 : i32, i32
  }
}

module attributes {stable_mosaic.version = 11 : i64} {
  func.func @_gru_kernel(%arg0: i32, %arg1: i32, %arg2: memref<16x32xf32, #tpu.memory_space<vmem>>, %arg3: memref<16x128xf32, #tpu.memory_space<vmem>>, %arg4: memref<16x128xf32, #tpu.memory_space<vmem>>, %arg5: memref<32x384xf32, #tpu.memory_space<vmem>>, %arg6: memref<128x384xf32, #tpu.memory_space<vmem>>, %arg7: memref<1x256xf32, #tpu.memory_space<vmem>>, %arg8: memref<1x128xf32, #tpu.memory_space<vmem>>, %arg9: memref<1x128xf32, #tpu.memory_space<vmem>>, %arg10: memref<16x128xf32, #tpu.memory_space<vmem>>) attributes {dimension_semantics = [#tpu.dimension_semantics<parallel>, #tpu.dimension_semantics<parallel>], iteration_bounds = array<i64: 1, 1>, scalar_prefetch = 0 : i64, scratch_operands = 0 : i64, tpu.core_type = #tpu.core_type<tc>, window_params = [{transform_indices = @transform_0, window_bounds = array<i64: 16, 32>}, {transform_indices = @transform_1, window_bounds = array<i64: 16, 128>}, {transform_indices = @transform_2, window_bounds = array<i64: 16, 128>}, {transform_indices = @transform_3, window_bounds = array<i64: 32, 384>}, {transform_indices = @transform_4, window_bounds = array<i64: 128, 384>}, {transform_indices = @transform_5, window_bounds = array<i64: 1, 256>}, {transform_indices = @transform_6, window_bounds = array<i64: 1, 128>}, {transform_indices = @transform_7, window_bounds = array<i64: 1, 128>}, {transform_indices = @transform_8, window_bounds = array<i64: 16, 128>}]} {
    %c0 = arith.constant 0 : index
    %c0_0 = arith.constant 0 : index
    %0 = vector.load %arg2[%c0, %c0_0] : memref<16x32xf32, #tpu.memory_space<vmem>>, vector<16x32xf32>
    %c0_1 = arith.constant 0 : index
    %c0_2 = arith.constant 0 : index
    %1 = vector.load %arg3[%c0_1, %c0_2] : memref<16x128xf32, #tpu.memory_space<vmem>>, vector<16x128xf32>
    %c0_3 = arith.constant 0 : index
    %c0_4 = arith.constant 0 : index
    %2 = vector.load %arg5[%c0_3, %c0_4] : memref<32x384xf32, #tpu.memory_space<vmem>>, vector<32x384xf32>
    %cst = arith.constant dense<0.000000e+00> : vector<16x384xf32>
    %3 = tpu.matmul %0, %2, %cst {dimension_numbers = #tpu.dot_dimension_numbers<[1], [0], [0], [1], [0, 0, 1, 1], [], []>} : vector<16x32xf32>, vector<32x384xf32>, vector<16x384xf32> -> vector<16x384xf32>
    %c0_5 = arith.constant 0 : index
    %c0_6 = arith.constant 0 : index
    %4 = vector.load %arg6[%c0_5, %c0_6] : memref<128x384xf32, #tpu.memory_space<vmem>>, vector<128x384xf32>
    %cst_7 = arith.constant dense<0.000000e+00> : vector<16x384xf32>
    %5 = tpu.matmul %1, %4, %cst_7 {dimension_numbers = #tpu.dot_dimension_numbers<[1], [0], [0], [1], [0, 0, 1, 1], [], []>} : vector<16x128xf32>, vector<128x384xf32>, vector<16x384xf32> -> vector<16x384xf32>
    %6 = vector.extract_strided_slice %3 {offsets = [0, 0], sizes = [16, 256], strides = [1, 1]} : vector<16x384xf32> to vector<16x256xf32>
    %7 = vector.extract_strided_slice %5 {offsets = [0, 0], sizes = [16, 256], strides = [1, 1]} : vector<16x384xf32> to vector<16x256xf32>
    %8 = arith.addf %6, %7 : vector<16x256xf32>
    %c0_8 = arith.constant 0 : index
    %c0_9 = arith.constant 0 : index
    %9 = vector.load %arg7[%c0_8, %c0_9] : memref<1x256xf32, #tpu.memory_space<vmem>>, vector<1x256xf32>
    %10 = vector.broadcast %9 : vector<1x256xf32> to vector<16x256xf32>
    %11 = arith.addf %8, %10 : vector<16x256xf32>
    %cst_10 = arith.constant 5.000000e-01 : f32
    %12 = vector.broadcast %cst_10 : f32 to vector<16x256xf32>
    %13 = arith.mulf %12, %11 : vector<16x256xf32>
    %14 = math.tanh %13 : vector<16x256xf32>
    %cst_11 = arith.constant 1.000000e+00 : f32
    %15 = vector.broadcast %cst_11 : f32 to vector<16x256xf32>
    %16 = arith.addf %14, %15 : vector<16x256xf32>
    %cst_12 = arith.constant 5.000000e-01 : f32
    %17 = vector.broadcast %cst_12 : f32 to vector<16x256xf32>
    %18 = arith.mulf %17, %16 : vector<16x256xf32>
    %19 = vector.extract_strided_slice %18 {offsets = [0, 0], sizes = [16, 128], strides = [1, 1]} : vector<16x256xf32> to vector<16x128xf32>
    %20 = vector.extract_strided_slice %18 {offsets = [0, 128], sizes = [16, 128], strides = [1, 1]} : vector<16x256xf32> to vector<16x128xf32>
    %21 = vector.extract_strided_slice %3 {offsets = [0, 256], sizes = [16, 128], strides = [1, 1]} : vector<16x384xf32> to vector<16x128xf32>
    %c0_13 = arith.constant 0 : index
    %c0_14 = arith.constant 0 : index
    %22 = vector.load %arg8[%c0_13, %c0_14] : memref<1x128xf32, #tpu.memory_space<vmem>>, vector<1x128xf32>
    %23 = vector.broadcast %22 : vector<1x128xf32> to vector<16x128xf32>
    %24 = arith.addf %21, %23 : vector<16x128xf32>
    %25 = vector.extract_strided_slice %5 {offsets = [0, 256], sizes = [16, 128], strides = [1, 1]} : vector<16x384xf32> to vector<16x128xf32>
    %c0_15 = arith.constant 0 : index
    %c0_16 = arith.constant 0 : index
    %26 = vector.load %arg9[%c0_15, %c0_16] : memref<1x128xf32, #tpu.memory_space<vmem>>, vector<1x128xf32>
    %27 = vector.broadcast %26 : vector<1x128xf32> to vector<16x128xf32>
    %28 = arith.addf %25, %27 : vector<16x128xf32>
    %29 = arith.mulf %19, %28 : vector<16x128xf32>
    %30 = arith.addf %24, %29 : vector<16x128xf32>
    %31 = math.tanh %30 : vector<16x128xf32>
    %c0_17 = arith.constant 0 : index
    %c0_18 = arith.constant 0 : index
    %32 = vector.load %arg4[%c0_17, %c0_18] : memref<16x128xf32, #tpu.memory_space<vmem>>, vector<16x128xf32>
    %33 = arith.subf %32, %31 : vector<16x128xf32>
    %34 = arith.mulf %20, %33 : vector<16x128xf32>
    %35 = arith.addf %31, %34 : vector<16x128xf32>
    %c0_19 = arith.constant 0 : index
    %c0_20 = arith.constant 0 : index
    %36 = vector.load %arg10[%c0_19, %c0_20] : memref<16x128xf32, #tpu.memory_space<vmem>>, vector<16x128xf32>
    tpu.vector_store %arg10[%c0_19, %c0_20], %35 {strides = array<i32>} : memref<16x128xf32, #tpu.memory_space<vmem>>, vector<16x128xf32>,
    return
  }
  func.func @transform_0(%arg0: i32, %arg1: i32) -> (i32, i32) {
    %c0_i32 = arith.constant 0 : i32
    %c0_i32_0 = arith.constant 0 : i32
    return %arg0, %c0_i32 : i32, i32
  }
  func.func @transform_1(%arg0: i32, %arg1: i32) -> (i32, i32) {
    %c0_i32 = arith.constant 0 : i32
    %c0_i32_0 = arith.constant 0 : i32
    return %arg0, %c0_i32 : i32, i32
  }
  func.func @transform_2(%arg0: i32, %arg1: i32) -> (i32, i32) {
    %c0_i32 = arith.constant 0 : i32
    return %arg0, %arg1 : i32, i32
  }
  func.func @transform_3(%arg0: i32, %arg1: i32) -> (i32, i32) {
    %c0_i32 = arith.constant 0 : i32
    %c0_i32_0 = arith.constant 0 : i32
    return %c0_i32, %arg1 : i32, i32
  }
  func.func @transform_4(%arg0: i32, %arg1: i32) -> (i32, i32) {
    %c0_i32 = arith.constant 0 : i32
    %c0_i32_0 = arith.constant 0 : i32
    return %c0_i32, %arg1 : i32, i32
  }
  func.func @transform_5(%arg0: i32, %arg1: i32) -> (i32, i32) {
    %c0_i32 = arith.constant 0 : i32
    %c0_i32_0 = arith.constant 0 : i32
    return %c0_i32, %arg1 : i32, i32
  }
  func.func @transform_6(%arg0: i32, %arg1: i32) -> (i32, i32) {
    %c0_i32 = arith.constant 0 : i32
    %c0_i32_0 = arith.constant 0 : i32
    return %c0_i32, %arg1 : i32, i32
  }
  func.func @transform_7(%arg0: i32, %arg1: i32) -> (i32, i32) {
    %c0_i32 = arith.constant 0 : i32
    %c0_i32_0 = arith.constant 0 : i32
    return %c0_i32, %arg1 : i32, i32
  }
  func.func @transform_8(%arg0: i32, %arg1: i32) -> (i32, i32) {
    %c0_i32 = arith.constant 0 : i32
    return %arg0, %arg1 : i32, i32
  }
}

</mosaic_0001>

<llo_original>
// kernel: tpu_custom_call.1
$region0: #{tpu_custom_call.1}
  #allocation0 [shape = 'u32[]', space=smem, size = 0x4, offset = 0x4, fixed_abs, tag = 'smem constant byte address 0x4 - core index']
  #allocation1 [shape = 'u32[72,128]{1,0:T(1,128)}', space=vmem, size = 0x9000, scoped, tag = 'internal scratch']
  %s0 = inlined_call_operand.hbm [shape: f32[16,32], index: 0, kind: input, shape index: {}]
  %s1 = inlined_call_operand.hbm [shape: f32[16,128], index: 1, kind: input, shape index: {}]
  %s2 = inlined_call_operand.hbm [shape: f32[16,128], index: 2, kind: input, shape index: {}]
  %s3 = inlined_call_operand.hbm [shape: f32[32,384], index: 3, kind: input, shape index: {}]
  %s4 = inlined_call_operand.hbm [shape: f32[128,384], index: 4, kind: input, shape index: {}]
  %s5 = inlined_call_operand.vmem [shape: f32[1,256], index: 5, kind: input, shape index: {}]
  %s6 = inlined_call_operand.vmem [shape: f32[1,128], index: 6, kind: input, shape index: {}]
  %s7 = inlined_call_operand.vmem [shape: f32[1,128], index: 7, kind: input, shape index: {}]
  %s8 = inlined_call_operand.hbm [shape: f32[16,128], index: 8, kind: output, shape index: {}]
  %s9 = sld [smem:[#allocation0]]
  $region62: #{tpu_custom_call.1} parent=0
    _
  %s11 = ssub.s32 1, %s9
  %s12 = scalar_select 0, %s11, %s9
  $region1: #{tpu_custom_call.1} parent=0
    #allocation2 [shape = 'u8[8192]{0}', space=vmem, size = 0x2000, scoped, tag = 'input window, operand 0, single buffered']
    #allocation3 [shape = 's32[1]{0}', space=sflag, size = 0x4, scoped, tag = 'scoped memory for tpu_custom_call.1']
    #allocation4 [shape = 's32[1]{0}', space=sflag, size = 0x4, scoped, tag = 'scoped memory for tpu_custom_call.1']
    #allocation5 [shape = 'u8[8192]{0}', space=vmem, size = 0x2000, scoped, tag = 'input window, operand 1, single buffered']
    #allocation6 [shape = 's32[1]{0}', space=sflag, size = 0x4, scoped, tag = 'scoped memory for tpu_custom_call.1']
    #allocation7 [shape = 'u8[8192]{0}', space=vmem, size = 0x2000, scoped, tag = 'input window, operand 2, single buffered']
    #allocation8 [shape = 'u8[49152]{0}', space=vmem, size = 0xc000, scoped, tag = 'input window, operand 3, single buffered']
    #allocation9 [shape = 's32[1]{0}', space=sflag, size = 0x4, scoped, tag = 'scoped memory for tpu_custom_call.1']
    #allocation10 [shape = 'u8[196608]{0}', space=vmem, size = 0x30000, scoped, tag = 'input window, operand 4, single buffered']
    #allocation11 [shape = 'u8[8192]{0}', space=vmem, size = 0x2000, scoped, tag = 'output window, operand 0, single buffered']
    %13 = vsyncpa [#allocation3], 0
    %14 = vsyncpa [#allocation6], 0
    %15 = vsyncpa [#allocation9], 0
    %16 = vsyncpa [#allocation4], 0
    // Predicated region
    $region2: #{tpu_custom_call.1} parent=1 // pred_check
      _
    $region3: #{tpu_custom_call.1} parent=1 // pred_check_branch
      %18 = sbr.rel (0) target = $region5
    $region4: #{tpu_custom_call.1} parent=1 // pred_region
      %20 = vsyncadd [#allocation3], 0
      %s21 = sshll.u32 %s0, 4
      %s22 = int_to_ptr.hbm [resolvable:$true] %s21
      %s23 = sshll.u32 [#allocation2], 4
      %s24 = int_to_ptr.vmem [resolvable:$true] %s23
      %29 = dma.hbm_to_vmem [thread:$0]  %s22, 256, %s24, [#allocation3], 128, 128, 8
    $region5: #{tpu_custom_call.1} parent=1 // pred_fallthru
      _
    // Predicated region
    $region6: #{tpu_custom_call.1} parent=1 // pred_check
      _
    $region7: #{tpu_custom_call.1} parent=1 // pred_check_branch
      %31 = sbr.rel (0) target = $region9
    $region8: #{tpu_custom_call.1} parent=1 // pred_region
      %33 = vsyncadd [#allocation6], 0
      %s34 = sshll.u32 %s1, 4
      %s35 = int_to_ptr.hbm [resolvable:$true] %s34
      %s36 = sshll.u32 [#allocation5], 4
      %s37 = int_to_ptr.vmem [resolvable:$true] %s36
      %42 = dma.hbm_to_vmem [thread:$0]  %s35, 256, %s37, [#allocation6], 128, 128, 8
    $region9: #{tpu_custom_call.1} parent=1 // pred_fallthru
      _
    // Predicated region
    $region10: #{tpu_custom_call.1} parent=1 // pred_check
      _
    $region11: #{tpu_custom_call.1} parent=1 // pred_check_branch
      %44 = sbr.rel (0) target = $region13
    $region12: #{tpu_custom_call.1} parent=1 // pred_region
      %46 = vsyncadd [#allocation6], 0
      %s47 = sshll.u32 %s2, 4
      %s48 = int_to_ptr.hbm [resolvable:$true] %s47
      %s49 = sshll.u32 [#allocation7], 4
      %s50 = int_to_ptr.vmem [resolvable:$true] %s49
      %55 = dma.hbm_to_vmem [thread:$0]  %s48, 256, %s50, [#allocation6], 128, 128, 8
    $region13: #{tpu_custom_call.1} parent=1 // pred_fallthru
      _
    // Predicated region
    $region14: #{tpu_custom_call.1} parent=1 // pred_check
      _
    $region15: #{tpu_custom_call.1} parent=1 // pred_check_branch
      %57 = sbr.rel (0) target = $region17
    $region16: #{tpu_custom_call.1} parent=1 // pred_region
      %59 = vsyncadd [#allocation9], 0
      %s60 = sshll.u32 %s3, 4
      %s61 = int_to_ptr.hbm [resolvable:$true] %s60
      %s62 = sshll.u32 [#allocation8], 4
      %s63 = int_to_ptr.vmem [resolvable:$true] %s62
      %68 = dma.hbm_to_vmem [thread:$0]  %s61, 1536, %s63, [#allocation9], 384, 384, 24
    $region17: #{tpu_custom_call.1} parent=1 // pred_fallthru
      _
    // Predicated region
    $region18: #{tpu_custom_call.1} parent=1 // pred_check
      _
    $region19: #{tpu_custom_call.1} parent=1 // pred_check_branch
      %70 = sbr.rel (0) target = $region21
    $region20: #{tpu_custom_call.1} parent=1 // pred_region
      %72 = vsyncadd [#allocation9], 0
      %s73 = sshll.u32 %s4, 4
      %s74 = int_to_ptr.hbm [resolvable:$true] %s73
      %s75 = sshll.u32 [#allocation10], 4
      %s76 = int_to_ptr.vmem [resolvable:$true] %s75
      %81 = dma.hbm_to_vmem [thread:$0]  %s74, 6144, %s76, [#allocation9], 384, 384, 24
    $region21: #{tpu_custom_call.1} parent=1 // pred_fallthru
      _
    // Predicated region
    $region22: #{tpu_custom_call.1} parent=1 // pred_check
      _
    $region23: #{tpu_custom_call.1} parent=1 // pred_check_branch
      %83 = sbr.rel (0) target = $region25
    $region24: #{tpu_custom_call.1} parent=1 // pred_region
      _
    $region25: #{tpu_custom_call.1} parent=1 // pred_fallthru
      _
    // Predicated region
    $region26: #{tpu_custom_call.1} parent=1 // pred_check
      _
    $region27: #{tpu_custom_call.1} parent=1 // pred_check_branch
      %85 = sbr.rel (0) target = $region29
    $region28: #{tpu_custom_call.1} parent=1 // pred_region
      _
    $region29: #{tpu_custom_call.1} parent=1 // pred_fallthru
      _
    // Predicated region
    $region30: #{tpu_custom_call.1} parent=1 // pred_check
      _
    $region31: #{tpu_custom_call.1} parent=1 // pred_check_branch
      %87 = sbr.rel (0) target = $region33
    $region32: #{tpu_custom_call.1} parent=1 // pred_region
      _
    $region33: #{tpu_custom_call.1} parent=1 // pred_fallthru
      _
    // Predicated region
    $region34: #{tpu_custom_call.1} parent=1 // pred_check
      _
    $region35: #{tpu_custom_call.1} parent=1 // pred_check_branch
      %89 = sbr.rel (0) target = $region37
    $region36: #{tpu_custom_call.1} parent=1 // pred_region
      %91 = dma.done [#allocation3], 256
    $region37: #{tpu_custom_call.1} parent=1 // pred_fallthru
      _
    // Predicated region
    $region38: #{tpu_custom_call.1} parent=1 // pred_check
      _
    $region39: #{tpu_custom_call.1} parent=1 // pred_check_branch
      %93 = sbr.rel (0) target = $region41
    $region40: #{tpu_custom_call.1} parent=1 // pred_region
      %95 = dma.done [#allocation6], 256
    $region41: #{tpu_custom_call.1} parent=1 // pred_fallthru
      _
    // Predicated region
    $region42: #{tpu_custom_call.1} parent=1 // pred_check
      _
    $region43: #{tpu_custom_call.1} parent=1 // pred_check_branch
      %97 = sbr.rel (0) target = $region45
    $region44: #{tpu_custom_call.1} parent=1 // pred_region
      %99 = dma.done [#allocation6], 256
    $region45: #{tpu_custom_call.1} parent=1 // pred_fallthru
      _
    // Predicated region
    $region46: #{tpu_custom_call.1} parent=1 // pred_check
      _
    $region47: #{tpu_custom_call.1} parent=1 // pred_check_branch
      %101 = sbr.rel (0) target = $region49
    $region48: #{tpu_custom_call.1} parent=1 // pred_region
      %103 = dma.done [#allocation9], 1536
    $region49: #{tpu_custom_call.1} parent=1 // pred_fallthru
      _
    // Predicated region
    $region50: #{tpu_custom_call.1} parent=1 // pred_check
      _
    $region51: #{tpu_custom_call.1} parent=1 // pred_check_branch
      %105 = sbr.rel (0) target = $region53
    $region52: #{tpu_custom_call.1} parent=1 // pred_region
      %107 = dma.done [#allocation9], 6144
    $region53: #{tpu_custom_call.1} parent=1 // pred_fallthru
      _
    %v108 = vld [vmem:[#allocation2] sm:$0xff]
    %v109 = vld [vmem:[#allocation2 + $0x8] sm:$0xff]
    %v110 = vld [vmem:[#allocation5] sm:$0xff]
    %v111 = vld [vmem:[#allocation5 + $0x8] sm:$0xff]
    %v112 = vld [vmem:[#allocation8] sm:$0xff]
    %v113 = vld [vmem:[#allocation8 + $0x8] sm:$0xff]
    %v114 = vld [vmem:[#allocation8 + $0x10] sm:$0xff]
    %v115 = vld [vmem:[#allocation8 + $0x18] sm:$0xff]
    %v116 = vld [vmem:[#allocation8 + $0x20] sm:$0xff]
    %v117 = vld [vmem:[#allocation8 + $0x28] sm:$0xff]
    %v118 = vld [vmem:[#allocation8 + $0x30] sm:$0xff]
    %v119 = vld [vmem:[#allocation8 + $0x38] sm:$0xff]
    %v120 = vld [vmem:[#allocation8 + $0x40] sm:$0xff]
    %v121 = vld [vmem:[#allocation8 + $0x48] sm:$0xff]
    %v122 = vld [vmem:[#allocation8 + $0x50] sm:$0xff]
    %v123 = vld [vmem:[#allocation8 + $0x58] sm:$0xff]
    %vm124 = vcmask 261120
    %v126 = vsel %vm124, %v108, 0
    %v129 = vsel %vm124, %v109, 0
    %131 = vmatpush.msra.mxu0 0.0
    %132 = vmatpush.msra.mxu0 0.0
    %133 = vmatpush.msra.mxu0 0.0
    %134 = vmatpush.msra.mxu0 0.0
    %135 = vmatpush.msra.mxu0 0.0
    %136 = vmatpush.msra.mxu0 0.0
    %137 = vmatpush.msra.mxu0 0.0
    %138 = vmatpush.msra.mxu0 0.0
    %139 = vmatpush.msra.mxu0 0.0
    %140 = vmatpush.msra.mxu0 0.0
    %141 = vmatpush.msra.mxu0 0.0
    %142 = vmatpush.msra.mxu0 0.0
    %143 = vmatpush.msra.mxu0 %v121
    %144 = vmatpush.msra.mxu0 %v118
    %145 = vmatpush.msra.mxu0 %v115
    %146 = vmatpush.msra.mxu0 %v112
    %147 = vmatmul.f32.gmra.mxu0 %v126
    %v148 = vpop.f32.mrf.mxu0
    %v149 = vadd.f32 0.0, %v148
    %150 = vmatmul.f32.gmra.mxu0 %v129
    %v151 = vpop.f32.mrf.mxu0
    %v152 = vadd.f32 0.0, %v151
    %153 = vdwg.mxu0
    %154 = vmatpush.msra.mxu0 0.0
    %155 = vmatpush.msra.mxu0 0.0
    %156 = vmatpush.msra.mxu0 0.0
    %157 = vmatpush.msra.mxu0 0.0
    %158 = vmatpush.msra.mxu0 0.0
    %159 = vmatpush.msra.mxu0 0.0
    %160 = vmatpush.msra.mxu0 0.0
    %161 = vmatpush.msra.mxu0 0.0
    %162 = vmatpush.msra.mxu0 0.0
    %163 = vmatpush.msra.mxu0 0.0
    %164 = vmatpush.msra.mxu0 0.0
    %165 = vmatpush.msra.mxu0 0.0
    %166 = vmatpush.msra.mxu0 %v122
    %167 = vmatpush.msra.mxu0 %v119
    %168 = vmatpush.msra.mxu0 %v116
    %169 = vmatpush.msra.mxu0 %v113
    %170 = vmatmul.f32.gmra.mxu0 %v126
    %v171 = vpop.f32.mrf.mxu0
    %v172 = vadd.f32 0.0, %v171
    %173 = vmatmul.f32.gmra.mxu0 %v129
    %v174 = vpop.f32.mrf.mxu0
    %v175 = vadd.f32 0.0, %v174
    %176 = vdwg.mxu0
    %177 = vmatpush.msra.mxu0 0.0
    %178 = vmatpush.msra.mxu0 0.0
    %179 = vmatpush.msra.mxu0 0.0
    %180 = vmatpush.msra.mxu0 0.0
    %181 = vmatpush.msra.mxu0 0.0
    %182 = vmatpush.msra.mxu0 0.0
    %183 = vmatpush.msra.mxu0 0.0
    %184 = vmatpush.msra.mxu0 0.0
    %185 = vmatpush.msra.mxu0 0.0
    %186 = vmatpush.msra.mxu0 0.0
    %187 = vmatpush.msra.mxu0 0.0
    %188 = vmatpush.msra.mxu0 0.0
    %189 = vmatpush.msra.mxu0 %v123
    %190 = vmatpush.msra.mxu0 %v120
    %191 = vmatpush.msra.mxu0 %v117
    %192 = vmatpush.msra.mxu0 %v114
    %193 = vmatmul.f32.gmra.mxu0 %v126
    %v194 = vpop.f32.mrf.mxu0
    %v195 = vadd.f32 0.0, %v194
    %196 = vmatmul.f32.gmra.mxu0 %v129
    %v197 = vpop.f32.mrf.mxu0
    %v198 = vadd.f32 0.0, %v197
    %199 = vdwg.mxu0
    %v200 = vld [vmem:[#allocation10] sm:$0xff]
    %v201 = vld [vmem:[#allocation10 + $0x8] sm:$0xff]
    %v202 = vld [vmem:[#allocation10 + $0x10] sm:$0xff]
    %v203 = vld [vmem:[#allocation10 + $0x18] sm:$0xff]
    %v204 = vld [vmem:[#allocation10 + $0x20] sm:$0xff]
    %v205 = vld [vmem:[#allocation10 + $0x28] sm:$0xff]
    %v206 = vld [vmem:[#allocation10 + $0x30] sm:$0xff]
    %v207 = vld [vmem:[#allocation10 + $0x38] sm:$0xff]
    %v208 = vld [vmem:[#allocation10 + $0x40] sm:$0xff]
    %v209 = vld [vmem:[#allocation10 + $0x48] sm:$0xff]
    %v210 = vld [vmem:[#allocation10 + $0x50] sm:$0xff]
    %v211 = vld [vmem:[#allocation10 + $0x58] sm:$0xff]
    %v212 = vld [vmem:[#allocation10 + $0x60] sm:$0xff]
    %v213 = vld [vmem:[#allocation10 + $0x68] sm:$0xff]
    %v214 = vld [vmem:[#allocation10 + $0x70] sm:$0xff]
    %v215 = vld [vmem:[#allocation10 + $0x78] sm:$0xff]
    %v216 = vld [vmem:[#allocation10 + $0x80] sm:$0xff]
    %v217 = vld [vmem:[#allocation10 + $0x88] sm:$0xff]
    %v218 = vld [vmem:[#allocation10 + $0x90] sm:$0xff]
    %v219 = vld [vmem:[#allocation10 + $0x98] sm:$0xff]
    %v220 = vld [vmem:[#allocation10 + $0xa0] sm:$0xff]
    %v221 = vld [vmem:[#allocation10 + $0xa8] sm:$0xff]
    %v222 = vld [vmem:[#allocation10 + $0xb0] sm:$0xff]
    %v223 = vld [vmem:[#allocation10 + $0xb8] sm:$0xff]
    %v224 = vld [vmem:[#allocation10 + $0xc0] sm:$0xff]
    %v225 = vld [vmem:[#allocation10 + $0xc8] sm:$0xff]
    %v226 = vld [vmem:[#allocation10 + $0xd0] sm:$0xff]
    %v227 = vld [vmem:[#allocation10 + $0xd8] sm:$0xff]
    %v228 = vld [vmem:[#allocation10 + $0xe0] sm:$0xff]
    %v229 = vld [vmem:[#allocation10 + $0xe8] sm:$0xff]
    %v230 = vld [vmem:[#allocation10 + $0xf0] sm:$0xff]
    %v231 = vld [vmem:[#allocation10 + $0xf8] sm:$0xff]
    %v232 = vld [vmem:[#allocation10 + $0x100] sm:$0xff]
    %v233 = vld [vmem:[#allocation10 + $0x108] sm:$0xff]
    %v234 = vld [vmem:[#allocation10 + $0x110] sm:$0xff]
    %v235 = vld [vmem:[#allocation10 + $0x118] sm:$0xff]
    %v236 = vld [vmem:[#allocation10 + $0x120] sm:$0xff]
    %v237 = vld [vmem:[#allocation10 + $0x128] sm:$0xff]
    %v238 = vld [vmem:[#allocation10 + $0x130] sm:$0xff]
    %v239 = vld [vmem:[#allocation10 + $0x138] sm:$0xff]
    %v240 = vld [vmem:[#allocation10 + $0x140] sm:$0xff]
    %v241 = vld [vmem:[#allocation10 + $0x148] sm:$0xff]
    %v242 = vld [vmem:[#allocation10 + $0x150] sm:$0xff]
    %v243 = vld [vmem:[#allocation10 + $0x158] sm:$0xff]
    %v244 = vld [vmem:[#allocation10 + $0x160] sm:$0xff]
    %v245 = vld [vmem:[#allocation10 + $0x168] sm:$0xff]
    %v246 = vld [vmem:[#allocation10 + $0x170] sm:$0xff]
    %v247 = vld [vmem:[#allocation10 + $0x178] sm:$0xff]
    %248 = vmatpush.msra.mxu0 %v245
    %249 = vmatpush.msra.mxu0 %v242
    %250 = vmatpush.msra.mxu0 %v239
    %251 = vmatpush.msra.mxu0 %v236
    %252 = vmatpush.msra.mxu0 %v233
    %253 = vmatpush.msra.mxu0 %v230
    %254 = vmatpush.msra.mxu0 %v227
    %255 = vmatpush.msra.mxu0 %v224
    %256 = vmatpush.msra.mxu0 %v221
    %257 = vmatpush.msra.mxu0 %v218
    %258 = vmatpush.msra.mxu0 %v215
    %259 = vmatpush.msra.mxu0 %v212
    %260 = vmatpush.msra.mxu0 %v209
    %261 = vmatpush.msra.mxu0 %v206
    %262 = vmatpush.msra.mxu0 %v203
    %263 = vmatpush.msra.mxu0 %v200
    %264 = vmatmul.f32.gmra.mxu0 %v110
    %v265 = vpop.f32.mrf.mxu0
    %v266 = vadd.f32 0.0, %v265
    %267 = vmatmul.f32.gmra.mxu0 %v111
    %v268 = vpop.f32.mrf.mxu0
    %v269 = vadd.f32 0.0, %v268
    %270 = vdwg.mxu0
    %271 = vmatpush.msra.mxu0 %v246
    %272 = vmatpush.msra.mxu0 %v243
    %273 = vmatpush.msra.mxu0 %v240
    %274 = vmatpush.msra.mxu0 %v237
    %275 = vmatpush.msra.mxu0 %v234
    %276 = vmatpush.msra.mxu0 %v231
    %277 = vmatpush.msra.mxu0 %v228
    %278 = vmatpush.msra.mxu0 %v225
    %279 = vmatpush.msra.mxu0 %v222
    %280 = vmatpush.msra.mxu0 %v219
    %281 = vmatpush.msra.mxu0 %v216
    %282 = vmatpush.msra.mxu0 %v213
    %283 = vmatpush.msra.mxu0 %v210
    %284 = vmatpush.msra.mxu0 %v207
    %285 = vmatpush.msra.mxu0 %v204
    %286 = vmatpush.msra.mxu0 %v201
    %287 = vmatmul.f32.gmra.mxu0 %v110
    %v288 = vpop.f32.mrf.mxu0
    %v289 = vadd.f32 0.0, %v288
    %290 = vmatmul.f32.gmra.mxu0 %v111
    %v291 = vpop.f32.mrf.mxu0
    %v292 = vadd.f32 0.0, %v291
    %293 = vdwg.mxu0
    %294 = vmatpush.msra.mxu0 %v247
    %295 = vmatpush.msra.mxu0 %v244
    %296 = vmatpush.msra.mxu0 %v241
    %297 = vmatpush.msra.mxu0 %v238
    %298 = vmatpush.msra.mxu0 %v235
    %299 = vmatpush.msra.mxu0 %v232
    %300 = vmatpush.msra.mxu0 %v229
    %301 = vmatpush.msra.mxu0 %v226
    %302 = vmatpush.msra.mxu0 %v223
    %303 = vmatpush.msra.mxu0 %v220
    %304 = vmatpush.msra.mxu0 %v217
    %305 = vmatpush.msra.mxu0 %v214
    %306 = vmatpush.msra.mxu0 %v211
    %307 = vmatpush.msra.mxu0 %v208
    %308 = vmatpush.msra.mxu0 %v205
    %309 = vmatpush.msra.mxu0 %v202
    %310 = vmatmul.f32.gmra.mxu0 %v110
    %v311 = vpop.f32.mrf.mxu0
    %v312 = vadd.f32 0.0, %v311
    %313 = vmatmul.f32.gmra.mxu0 %v111
    %v314 = vpop.f32.mrf.mxu0
    %v315 = vadd.f32 0.0, %v314
    %316 = vdwg.mxu0
    %v317 = vadd.f32 %v149, %v266
    %v318 = vadd.f32 %v172, %v289
    %v319 = vadd.f32 %v152, %v269
    %v320 = vadd.f32 %v175, %v292
    %v321 = vld [vmem:[%s5] sm:$0x3]
    %v323 = vperm.slane %v321, 0
    %v324 = vperm.slane %v321, 1
    %v327 = vadd.f32 %v317, %v323
    %v328 = vadd.f32 %v318, %v324
    %v329 = vadd.f32 %v319, %v323
    %v330 = vadd.f32 %v320, %v324
    %v331 = vmul.f32 %v327, 0.5
    %v332 = vmul.f32 %v328, 0.5
    %v333 = vmul.f32 %v329, 0.5
    %v334 = vmul.f32 %v330, 0.5
    %v335 = vtanh.pop %v331
    %v336 = vtanh.pop %v332
    %v337 = vtanh.pop %v333
    %v338 = vtanh.pop %v334
    %v339 = vadd.f32 %v335, 1.0
    %v340 = vadd.f32 %v336, 1.0
    %v341 = vadd.f32 %v337, 1.0
    %v342 = vadd.f32 %v338, 1.0
    %v343 = vmul.f32 %v339, 0.5
    %v344 = vmul.f32 %v340, 0.5
    %v345 = vmul.f32 %v341, 0.5
    %v346 = vmul.f32 %v342, 0.5
    %v347 = vld [vmem:[%s6] sm:$0x1]
    %v349 = vperm.slane %v347, 0
    %v351 = vadd.f32 %v195, %v349
    %v352 = vadd.f32 %v198, %v349
    %v353 = vld [vmem:[%s7] sm:$0x1]
    %v355 = vperm.slane %v353, 0
    %v357 = vadd.f32 %v312, %v355
    %v358 = vadd.f32 %v315, %v355
    %v359 = vmul.f32 %v343, %v357
    %v360 = vmul.f32 %v345, %v358
    %v361 = vadd.f32 %v351, %v359
    %v362 = vadd.f32 %v352, %v360
    %v363 = vtanh.pop %v361
    %v364 = vtanh.pop %v362
    %v365 = vld [vmem:[#allocation7] sm:$0xff]
    %v366 = vld [vmem:[#allocation7 + $0x8] sm:$0xff]
    %v367 = vsub.f32 %v365, %v363
    %v368 = vsub.f32 %v366, %v364
    %v369 = vmul.f32 %v344, %v367
    %v370 = vmul.f32 %v346, %v368
    %v371 = vadd.f32 %v363, %v369
    %v372 = vadd.f32 %v364, %v370
    %373 = vst [vmem:[#allocation11] sm:$0xff] %v371
    %374 = vst [vmem:[#allocation11 + $0x8] sm:$0xff] %v372
    // Predicated region
    $region54: #{tpu_custom_call.1} parent=1 // pred_check
      _
    $region55: #{tpu_custom_call.1} parent=1 // pred_check_branch
      %376 = sbr.rel (0) target = $region57
    $region56: #{tpu_custom_call.1} parent=1 // pred_region
      %378 = vsyncadd [#allocation4], 0
      %s379 = sshll.u32 [#allocation11], 4
      %s380 = int_to_ptr.vmem [resolvable:$true] %s379
      %s381 = sshll.u32 %s8, 4
      %s382 = int_to_ptr.hbm [resolvable:$true] %s381
      %387 = dma.vmem_to_hbm [thread:$0]  %s380, 256, %s382, [#allocation4], 128, 128, 8
    $region57: #{tpu_custom_call.1} parent=1 // pred_fallthru
      _
    // Predicated region
    $region58: #{tpu_custom_call.1} parent=1 // pred_check
      _
    $region59: #{tpu_custom_call.1} parent=1 // pred_check_branch
      %389 = sbr.rel (0) target = $region61
    $region60: #{tpu_custom_call.1} parent=1 // pred_region
      %391 = dma.done [#allocation4], 256
    $region61: #{tpu_custom_call.1} parent=1 // pred_fallthru
      _
    %392 = vsyncpa [#allocation3], 1
    %393 = vsyncpa [#allocation6], 1
    %394 = vsyncpa [#allocation9], 1
    %395 = vsyncpa [#allocation4], 1

// kernel: tpu_custom_call.1
$region0: #{tpu_custom_call.1}
  #allocation0 [shape = 'u32[]', space=smem, size = 0x4, offset = 0x4, fixed_abs, tag = 'smem constant byte address 0x4 - core index']
  #allocation1 [shape = 'u32[72,128]{1,0:T(1,128)}', space=vmem, size = 0x9000, scoped, tag = 'internal scratch']
  %s0 = inlined_call_operand.hbm [shape: f32[16,32], index: 0, kind: input, shape index: {}]
  %s1 = inlined_call_operand.hbm [shape: f32[16,128], index: 1, kind: input, shape index: {}]
  %s2 = inlined_call_operand.hbm [shape: f32[16,128], index: 2, kind: input, shape index: {}]
  %s3 = inlined_call_operand.hbm [shape: f32[32,384], index: 3, kind: input, shape index: {}]
  %s4 = inlined_call_operand.hbm [shape: f32[128,384], index: 4, kind: input, shape index: {}]
  %s5 = inlined_call_operand.vmem [shape: f32[1,256], index: 5, kind: input, shape index: {}]
  %s6 = inlined_call_operand.vmem [shape: f32[1,128], index: 6, kind: input, shape index: {}]
  %s7 = inlined_call_operand.vmem [shape: f32[1,128], index: 7, kind: input, shape index: {}]
  %s8 = inlined_call_operand.hbm [shape: f32[16,128], index: 8, kind: output, shape index: {}]
  %s9 = sld [smem:[#allocation0]]
  $region62: #{tpu_custom_call.1} parent=0
    _
  %s11 = ssub.s32 1, %s9
  %s12 = scalar_select 0, %s11, %s9
  $region1: #{tpu_custom_call.1} parent=0
    #allocation2 [shape = 'u8[8192]{0}', space=vmem, size = 0x2000, scoped, tag = 'input window, operand 0, single buffered']
    #allocation3 [shape = 's32[1]{0}', space=sflag, size = 0x4, scoped, tag = 'scoped memory for tpu_custom_call.1']
    #allocation4 [shape = 's32[1]{0}', space=sflag, size = 0x4, scoped, tag = 'scoped memory for tpu_custom_call.1']
    #allocation5 [shape = 'u8[8192]{0}', space=vmem, size = 0x2000, scoped, tag = 'input window, operand 1, single buffered']
    #allocation6 [shape = 's32[1]{0}', space=sflag, size = 0x4, scoped, tag = 'scoped memory for tpu_custom_call.1']
    #allocation7 [shape = 'u8[8192]{0}', space=vmem, size = 0x2000, scoped, tag = 'input window, operand 2, single buffered']
    #allocation8 [shape = 'u8[49152]{0}', space=vmem, size = 0xc000, scoped, tag = 'input window, operand 3, single buffered']
    #allocation9 [shape = 's32[1]{0}', space=sflag, size = 0x4, scoped, tag = 'scoped memory for tpu_custom_call.1']
    #allocation10 [shape = 'u8[196608]{0}', space=vmem, size = 0x30000, scoped, tag = 'input window, operand 4, single buffered']
    #allocation11 [shape = 'u8[8192]{0}', space=vmem, size = 0x2000, scoped, tag = 'output window, operand 0, single buffered']
    %13 = vsyncpa [#allocation3], 0
    %14 = vsyncpa [#allocation6], 0
    %15 = vsyncpa [#allocation9], 0
    %16 = vsyncpa [#allocation4], 0
    // Predicated region
    $region2: #{tpu_custom_call.1} parent=1 // pred_check
      _
    $region3: #{tpu_custom_call.1} parent=1 // pred_check_branch
      %18 = sbr.rel (0) target = $region5
    $region4: #{tpu_custom_call.1} parent=1 // pred_region
      %20 = vsyncadd [#allocation3], 0
      %s21 = sshll.u32 %s0, 4
      %s22 = int_to_ptr.hbm [resolvable:$true] %s21
      %s23 = sshll.u32 [#allocation2], 4
      %s24 = int_to_ptr.vmem [resolvable:$true] %s23
      %29 = dma.hbm_to_vmem [thread:$0]  %s22, 256, %s24, [#allocation3], 128, 128, 8
    $region5: #{tpu_custom_call.1} parent=1 // pred_fallthru
      _
    // Predicated region
    $region6: #{tpu_custom_call.1} parent=1 // pred_check
      _
    $region7: #{tpu_custom_call.1} parent=1 // pred_check_branch
      %31 = sbr.rel (0) target = $region9
    $region8: #{tpu_custom_call.1} parent=1 // pred_region
      %33 = vsyncadd [#allocation6], 0
      %s34 = sshll.u32 %s1, 4
      %s35 = int_to_ptr.hbm [resolvable:$true] %s34
      %s36 = sshll.u32 [#allocation5], 4
      %s37 = int_to_ptr.vmem [resolvable:$true] %s36
      %42 = dma.hbm_to_vmem [thread:$0]  %s35, 256, %s37, [#allocation6], 128, 128, 8
    $region9: #{tpu_custom_call.1} parent=1 // pred_fallthru
      _
    // Predicated region
    $region10: #{tpu_custom_call.1} parent=1 // pred_check
      _
    $region11: #{tpu_custom_call.1} parent=1 // pred_check_branch
      %44 = sbr.rel (0) target = $region13
    $region12: #{tpu_custom_call.1} parent=1 // pred_region
      %46 = vsyncadd [#allocation6], 0
      %s47 = sshll.u32 %s2, 4
      %s48 = int_to_ptr.hbm [resolvable:$true] %s47
      %s49 = sshll.u32 [#allocation7], 4
      %s50 = int_to_ptr.vmem [resolvable:$true] %s49
      %55 = dma.hbm_to_vmem [thread:$0]  %s48, 256, %s50, [#allocation6], 128, 128, 8
    $region13: #{tpu_custom_call.1} parent=1 // pred_fallthru
      _
    // Predicated region
    $region14: #{tpu_custom_call.1} parent=1 // pred_check
      _
    $region15: #{tpu_custom_call.1} parent=1 // pred_check_branch
      %57 = sbr.rel (0) target = $region17
    $region16: #{tpu_custom_call.1} parent=1 // pred_region
      %59 = vsyncadd [#allocation9], 0
      %s60 = sshll.u32 %s3, 4
      %s61 = int_to_ptr.hbm [resolvable:$true] %s60
      %s62 = sshll.u32 [#allocation8], 4
      %s63 = int_to_ptr.vmem [resolvable:$true] %s62
      %68 = dma.hbm_to_vmem [thread:$0]  %s61, 1536, %s63, [#allocation9], 384, 384, 24
    $region17: #{tpu_custom_call.1} parent=1 // pred_fallthru
      _
    // Predicated region
    $region18: #{tpu_custom_call.1} parent=1 // pred_check
      _
    $region19: #{tpu_custom_call.1} parent=1 // pred_check_branch
      %70 = sbr.rel (0) target = $region21
    $region20: #{tpu_custom_call.1} parent=1 // pred_region
      %72 = vsyncadd [#allocation9], 0
      %s73 = sshll.u32 %s4, 4
      %s74 = int_to_ptr.hbm [resolvable:$true] %s73
      %s75 = sshll.u32 [#allocation10], 4
      %s76 = int_to_ptr.vmem [resolvable:$true] %s75
      %81 = dma.hbm_to_vmem [thread:$0]  %s74, 6144, %s76, [#allocation9], 384, 384, 24
    $region21: #{tpu_custom_call.1} parent=1 // pred_fallthru
      _
    // Predicated region
    $region22: #{tpu_custom_call.1} parent=1 // pred_check
      _
    $region23: #{tpu_custom_call.1} parent=1 // pred_check_branch
      %83 = sbr.rel (0) target = $region25
    $region24: #{tpu_custom_call.1} parent=1 // pred_region
      _
    $region25: #{tpu_custom_call.1} parent=1 // pred_fallthru
      _
    // Predicated region
    $region26: #{tpu_custom_call.1} parent=1 // pred_check
      _
    $region27: #{tpu_custom_call.1} parent=1 // pred_check_branch
      %85 = sbr.rel (0) target = $region29
    $region28: #{tpu_custom_call.1} parent=1 // pred_region
      _
    $region29: #{tpu_custom_call.1} parent=1 // pred_fallthru
      _
    // Predicated region
    $region30: #{tpu_custom_call.1} parent=1 // pred_check
      _
    $region31: #{tpu_custom_call.1} parent=1 // pred_check_branch
      %87 = sbr.rel (0) target = $region33
    $region32: #{tpu_custom_call.1} parent=1 // pred_region
      _
    $region33: #{tpu_custom_call.1} parent=1 // pred_fallthru
      _
    // Predicated region
    $region34: #{tpu_custom_call.1} parent=1 // pred_check
      _
    $region35: #{tpu_custom_call.1} parent=1 // pred_check_branch
      %89 = sbr.rel (0) target = $region37
    $region36: #{tpu_custom_call.1} parent=1 // pred_region
      %91 = dma.done [#allocation3], 256
    $region37: #{tpu_custom_call.1} parent=1 // pred_fallthru
      _
    // Predicated region
    $region38: #{tpu_custom_call.1} parent=1 // pred_check
      _
    $region39: #{tpu_custom_call.1} parent=1 // pred_check_branch
      %93 = sbr.rel (0) target = $region41
    $region40: #{tpu_custom_call.1} parent=1 // pred_region
      %95 = dma.done [#allocation6], 256
    $region41: #{tpu_custom_call.1} parent=1 // pred_fallthru
      _
    // Predicated region
    $region42: #{tpu_custom_call.1} parent=1 // pred_check
      _
    $region43: #{tpu_custom_call.1} parent=1 // pred_check_branch
      %97 = sbr.rel (0) target = $region45
    $region44: #{tpu_custom_call.1} parent=1 // pred_region
      %99 = dma.done [#allocation6], 256
    $region45: #{tpu_custom_call.1} parent=1 // pred_fallthru
      _
    // Predicated region
    $region46: #{tpu_custom_call.1} parent=1 // pred_check
      _
    $region47: #{tpu_custom_call.1} parent=1 // pred_check_branch
      %101 = sbr.rel (0) target = $region49
    $region48: #{tpu_custom_call.1} parent=1 // pred_region
      %103 = dma.done [#allocation9], 1536
    $region49: #{tpu_custom_call.1} parent=1 // pred_fallthru
      _
    // Predicated region
    $region50: #{tpu_custom_call.1} parent=1 // pred_check
      _
    $region51: #{tpu_custom_call.1} parent=1 // pred_check_branch
      %105 = sbr.rel (0) target = $region53
    $region52: #{tpu_custom_call.1} parent=1 // pred_region
      %107 = dma.done [#allocation9], 6144
    $region53: #{tpu_custom_call.1} parent=1 // pred_fallthru
      _
    %v108 = vld [vmem:[#allocation2] sm:$0xff]
    %v109 = vld [vmem:[#allocation2 + $0x8] sm:$0xff]
    %v110 = vld [vmem:[#allocation5] sm:$0xff]
    %v111 = vld [vmem:[#allocation5 + $0x8] sm:$0xff]
    %v112 = vld [vmem:[#allocation8] sm:$0xff]
    %v113 = vld [vmem:[#allocation8 + $0x8] sm:$0xff]
    %v114 = vld [vmem:[#allocation8 + $0x10] sm:$0xff]
    %v115 = vld [vmem:[#allocation8 + $0x18] sm:$0xff]
    %v116 = vld [vmem:[#allocation8 + $0x20] sm:$0xff]
    %v117 = vld [vmem:[#allocation8 + $0x28] sm:$0xff]
    %v118 = vld [vmem:[#allocation8 + $0x30] sm:$0xff]
    %v119 = vld [vmem:[#allocation8 + $0x38] sm:$0xff]
    %v120 = vld [vmem:[#allocation8 + $0x40] sm:$0xff]
    %v121 = vld [vmem:[#allocation8 + $0x48] sm:$0xff]
    %v122 = vld [vmem:[#allocation8 + $0x50] sm:$0xff]
    %v123 = vld [vmem:[#allocation8 + $0x58] sm:$0xff]
    %vm124 = vcmask 261120
    %v126 = vsel %vm124, %v108, 0
    %v129 = vsel %vm124, %v109, 0
    %131 = vmatpush.msra.mxu0 0.0
    %132 = vmatpush.msra.mxu0 0.0
    %133 = vmatpush.msra.mxu0 0.0
    %134 = vmatpush.msra.mxu0 0.0
    %135 = vmatpush.msra.mxu0 0.0
    %136 = vmatpush.msra.mxu0 0.0
    %137 = vmatpush.msra.mxu0 0.0
    %138 = vmatpush.msra.mxu0 0.0
    %139 = vmatpush.msra.mxu0 0.0
    %140 = vmatpush.msra.mxu0 0.0
    %141 = vmatpush.msra.mxu0 0.0
    %142 = vmatpush.msra.mxu0 0.0
    %143 = vmatpush.msra.mxu0 %v121
    %144 = vmatpush.msra.mxu0 %v118
    %145 = vmatpush.msra.mxu0 %v115
    %146 = vmatpush.msra.mxu0 %v112
    %147 = vmatmul.f32.gmra.mxu0 %v126
    %v148 = vpop.f32.mrf.mxu0
    %v149 = vadd.f32 0.0, %v148
    %150 = vmatmul.f32.gmra.mxu0 %v129
    %v151 = vpop.f32.mrf.mxu0
    %v152 = vadd.f32 0.0, %v151
    %153 = vdwg.mxu0
    %154 = vmatpush.msra.mxu0 0.0
    %155 = vmatpush.msra.mxu0 0.0
    %156 = vmatpush.msra.mxu0 0.0
    %157 = vmatpush.msra.mxu0 0.0
    %158 = vmatpush.msra.mxu0 0.0
    %159 = vmatpush.msra.mxu0 0.0
    %160 = vmatpush.msra.mxu0 0.0
    %161 = vmatpush.msra.mxu0 0.0
    %162 = vmatpush.msra.mxu0 0.0
    %163 = vmatpush.msra.mxu0 0.0
    %164 = vmatpush.msra.mxu0 0.0
    %165 = vmatpush.msra.mxu0 0.0
    %166 = vmatpush.msra.mxu0 %v122
    %167 = vmatpush.msra.mxu0 %v119
    %168 = vmatpush.msra.mxu0 %v116
    %169 = vmatpush.msra.mxu0 %v113
    %170 = vmatmul.f32.gmra.mxu0 %v126
    %v171 = vpop.f32.mrf.mxu0
    %v172 = vadd.f32 0.0, %v171
    %173 = vmatmul.f32.gmra.mxu0 %v129
    %v174 = vpop.f32.mrf.mxu0
    %v175 = vadd.f32 0.0, %v174
    %176 = vdwg.mxu0
    %177 = vmatpush.msra.mxu0 0.0
    %178 = vmatpush.msra.mxu0 0.0
    %179 = vmatpush.msra.mxu0 0.0
    %180 = vmatpush.msra.mxu0 0.0
    %181 = vmatpush.msra.mxu0 0.0
    %182 = vmatpush.msra.mxu0 0.0
    %183 = vmatpush.msra.mxu0 0.0
    %184 = vmatpush.msra.mxu0 0.0
    %185 = vmatpush.msra.mxu0 0.0
    %186 = vmatpush.msra.mxu0 0.0
    %187 = vmatpush.msra.mxu0 0.0
    %188 = vmatpush.msra.mxu0 0.0
    %189 = vmatpush.msra.mxu0 %v123
    %190 = vmatpush.msra.mxu0 %v120
    %191 = vmatpush.msra.mxu0 %v117
    %192 = vmatpush.msra.mxu0 %v114
    %193 = vmatmul.f32.gmra.mxu0 %v126
    %v194 = vpop.f32.mrf.mxu0
    %v195 = vadd.f32 0.0, %v194
    %196 = vmatmul.f32.gmra.mxu0 %v129
    %v197 = vpop.f32.mrf.mxu0
    %v198 = vadd.f32 0.0, %v197
    %199 = vdwg.mxu0
    %v200 = vld [vmem:[#allocation10] sm:$0xff]
    %v201 = vld [vmem:[#allocation10 + $0x8] sm:$0xff]
    %v202 = vld [vmem:[#allocation10 + $0x10] sm:$0xff]
    %v203 = vld [vmem:[#allocation10 + $0x18] sm:$0xff]
    %v204 = vld [vmem:[#allocation10 + $0x20] sm:$0xff]
    %v205 = vld [vmem:[#allocation10 + $0x28] sm:$0xff]
    %v206 = vld [vmem:[#allocation10 + $0x30] sm:$0xff]
    %v207 = vld [vmem:[#allocation10 + $0x38] sm:$0xff]
    %v208 = vld [vmem:[#allocation10 + $0x40] sm:$0xff]
    %v209 = vld [vmem:[#allocation10 + $0x48] sm:$0xff]
    %v210 = vld [vmem:[#allocation10 + $0x50] sm:$0xff]
    %v211 = vld [vmem:[#allocation10 + $0x58] sm:$0xff]
    %v212 = vld [vmem:[#allocation10 + $0x60] sm:$0xff]
    %v213 = vld [vmem:[#allocation10 + $0x68] sm:$0xff]
    %v214 = vld [vmem:[#allocation10 + $0x70] sm:$0xff]
    %v215 = vld [vmem:[#allocation10 + $0x78] sm:$0xff]
    %v216 = vld [vmem:[#allocation10 + $0x80] sm:$0xff]
    %v217 = vld [vmem:[#allocation10 + $0x88] sm:$0xff]
    %v218 = vld [vmem:[#allocation10 + $0x90] sm:$0xff]
    %v219 = vld [vmem:[#allocation10 + $0x98] sm:$0xff]
    %v220 = vld [vmem:[#allocation10 + $0xa0] sm:$0xff]
    %v221 = vld [vmem:[#allocation10 + $0xa8] sm:$0xff]
    %v222 = vld [vmem:[#allocation10 + $0xb0] sm:$0xff]
    %v223 = vld [vmem:[#allocation10 + $0xb8] sm:$0xff]
    %v224 = vld [vmem:[#allocation10 + $0xc0] sm:$0xff]
    %v225 = vld [vmem:[#allocation10 + $0xc8] sm:$0xff]
    %v226 = vld [vmem:[#allocation10 + $0xd0] sm:$0xff]
    %v227 = vld [vmem:[#allocation10 + $0xd8] sm:$0xff]
    %v228 = vld [vmem:[#allocation10 + $0xe0] sm:$0xff]
    %v229 = vld [vmem:[#allocation10 + $0xe8] sm:$0xff]
    %v230 = vld [vmem:[#allocation10 + $0xf0] sm:$0xff]
    %v231 = vld [vmem:[#allocation10 + $0xf8] sm:$0xff]
    %v232 = vld [vmem:[#allocation10 + $0x100] sm:$0xff]
    %v233 = vld [vmem:[#allocation10 + $0x108] sm:$0xff]
    %v234 = vld [vmem:[#allocation10 + $0x110] sm:$0xff]
    %v235 = vld [vmem:[#allocation10 + $0x118] sm:$0xff]
    %v236 = vld [vmem:[#allocation10 + $0x120] sm:$0xff]
    %v237 = vld [vmem:[#allocation10 + $0x128] sm:$0xff]
    %v238 = vld [vmem:[#allocation10 + $0x130] sm:$0xff]
    %v239 = vld [vmem:[#allocation10 + $0x138] sm:$0xff]
    %v240 = vld [vmem:[#allocation10 + $0x140] sm:$0xff]
    %v241 = vld [vmem:[#allocation10 + $0x148] sm:$0xff]
    %v242 = vld [vmem:[#allocation10 + $0x150] sm:$0xff]
    %v243 = vld [vmem:[#allocation10 + $0x158] sm:$0xff]
    %v244 = vld [vmem:[#allocation10 + $0x160] sm:$0xff]
    %v245 = vld [vmem:[#allocation10 + $0x168] sm:$0xff]
    %v246 = vld [vmem:[#allocation10 + $0x170] sm:$0xff]
    %v247 = vld [vmem:[#allocation10 + $0x178] sm:$0xff]
    %248 = vmatpush.msra.mxu0 %v245
    %249 = vmatpush.msra.mxu0 %v242
    %250 = vmatpush.msra.mxu0 %v239
    %251 = vmatpush.msra.mxu0 %v236
    %252 = vmatpush.msra.mxu0 %v233
    %253 = vmatpush.msra.mxu0 %v230
    %254 = vmatpush.msra.mxu0 %v227
    %255 = vmatpush.msra.mxu0 %v224
    %256 = vmatpush.msra.mxu0 %v221
    %257 = vmatpush.msra.mxu0 %v218
    %258 = vmatpush.msra.mxu0 %v215
    %259 = vmatpush.msra.mxu0 %v212
    %260 = vmatpush.msra.mxu0 %v209
    %261 = vmatpush.msra.mxu0 %v206
    %262 = vmatpush.msra.mxu0 %v203
    %263 = vmatpush.msra.mxu0 %v200
    %264 = vmatmul.f32.gmra.mxu0 %v110
    %v265 = vpop.f32.mrf.mxu0
    %v266 = vadd.f32 0.0, %v265
    %267 = vmatmul.f32.gmra.mxu0 %v111
    %v268 = vpop.f32.mrf.mxu0
    %v269 = vadd.f32 0.0, %v268
    %270 = vdwg.mxu0
    %271 = vmatpush.msra.mxu0 %v246
    %272 = vmatpush.msra.mxu0 %v243
    %273 = vmatpush.msra.mxu0 %v240
    %274 = vmatpush.msra.mxu0 %v237
    %275 = vmatpush.msra.mxu0 %v234
    %276 = vmatpush.msra.mxu0 %v231
    %277 = vmatpush.msra.mxu0 %v228
    %278 = vmatpush.msra.mxu0 %v225
    %279 = vmatpush.msra.mxu0 %v222
    %280 = vmatpush.msra.mxu0 %v219
    %281 = vmatpush.msra.mxu0 %v216
    %282 = vmatpush.msra.mxu0 %v213
    %283 = vmatpush.msra.mxu0 %v210
    %284 = vmatpush.msra.mxu0 %v207
    %285 = vmatpush.msra.mxu0 %v204
    %286 = vmatpush.msra.mxu0 %v201
    %287 = vmatmul.f32.gmra.mxu0 %v110
    %v288 = vpop.f32.mrf.mxu0
    %v289 = vadd.f32 0.0, %v288
    %290 = vmatmul.f32.gmra.mxu0 %v111
    %v291 = vpop.f32.mrf.mxu0
    %v292 = vadd.f32 0.0, %v291
    %293 = vdwg.mxu0
    %294 = vmatpush.msra.mxu0 %v247
    %295 = vmatpush.msra.mxu0 %v244
    %296 = vmatpush.msra.mxu0 %v241
    %297 = vmatpush.msra.mxu0 %v238
    %298 = vmatpush.msra.mxu0 %v235
    %299 = vmatpush.msra.mxu0 %v232
    %300 = vmatpush.msra.mxu0 %v229
    %301 = vmatpush.msra.mxu0 %v226
    %302 = vmatpush.msra.mxu0 %v223
    %303 = vmatpush.msra.mxu0 %v220
    %304 = vmatpush.msra.mxu0 %v217
    %305 = vmatpush.msra.mxu0 %v214
    %306 = vmatpush.msra.mxu0 %v211
    %307 = vmatpush.msra.mxu0 %v208
    %308 = vmatpush.msra.mxu0 %v205
    %309 = vmatpush.msra.mxu0 %v202
    %310 = vmatmul.f32.gmra.mxu0 %v110
    %v311 = vpop.f32.mrf.mxu0
    %v312 = vadd.f32 0.0, %v311
    %313 = vmatmul.f32.gmra.mxu0 %v111
    %v314 = vpop.f32.mrf.mxu0
    %v315 = vadd.f32 0.0, %v314
    %316 = vdwg.mxu0
    %v317 = vadd.f32 %v149, %v266
    %v318 = vadd.f32 %v172, %v289
    %v319 = vadd.f32 %v152, %v269
    %v320 = vadd.f32 %v175, %v292
    %v321 = vld [vmem:[%s5] sm:$0x3]
    %v323 = vperm.slane %v321, 0
    %v324 = vperm.slane %v321, 1
    %v327 = vadd.f32 %v317, %v323
    %v328 = vadd.f32 %v318, %v324
    %v329 = vadd.f32 %v319, %v323
    %v330 = vadd.f32 %v320, %v324
    %v331 = vmul.f32 %v327, 0.5
    %v332 = vmul.f32 %v328, 0.5
    %v333 = vmul.f32 %v329, 0.5
    %v334 = vmul.f32 %v330, 0.5
    %v335 = vtanh.pop %v331
    %v336 = vtanh.pop %v332
    %v337 = vtanh.pop %v333
    %v338 = vtanh.pop %v334
    %v339 = vadd.f32 %v335, 1.0
    %v340 = vadd.f32 %v336, 1.0
    %v341 = vadd.f32 %v337, 1.0
    %v342 = vadd.f32 %v338, 1.0
    %v343 = vmul.f32 %v339, 0.5
    %v344 = vmul.f32 %v340, 0.5
    %v345 = vmul.f32 %v341, 0.5
    %v346 = vmul.f32 %v342, 0.5
    %v347 = vld [vmem:[%s6] sm:$0x1]
    %v349 = vperm.slane %v347, 0
    %v351 = vadd.f32 %v195, %v349
    %v352 = vadd.f32 %v198, %v349
    %v353 = vld [vmem:[%s7] sm:$0x1]
    %v355 = vperm.slane %v353, 0
    %v357 = vadd.f32 %v312, %v355
    %v358 = vadd.f32 %v315, %v355
    %v359 = vmul.f32 %v343, %v357
    %v360 = vmul.f32 %v345, %v358
    %v361 = vadd.f32 %v351, %v359
    %v362 = vadd.f32 %v352, %v360
    %v363 = vtanh.pop %v361
    %v364 = vtanh.pop %v362
    %v365 = vld [vmem:[#allocation7] sm:$0xff]
    %v366 = vld [vmem:[#allocation7 + $0x8] sm:$0xff]
    %v367 = vsub.f32 %v365, %v363
    %v368 = vsub.f32 %v366, %v364
    %v369 = vmul.f32 %v344, %v367
    %v370 = vmul.f32 %v346, %v368
    %v371 = vadd.f32 %v363, %v369
    %v372 = vadd.f32 %v364, %v370
    %373 = vst [vmem:[#allocation11] sm:$0xff] %v371
    %374 = vst [vmem:[#allocation11 + $0x8] sm:$0xff] %v372
    // Predicated region
    $region54: #{tpu_custom_call.1} parent=1 // pred_check
      _
    $region55: #{tpu_custom_call.1} parent=1 // pred_check_branch
      %376 = sbr.rel (0) target = $region57
    $region56: #{tpu_custom_call.1} parent=1 // pred_region
      %378 = vsyncadd [#allocation4], 0
      %s379 = sshll.u32 [#allocation11], 4
      %s380 = int_to_ptr.vmem [resolvable:$true] %s379
      %s381 = sshll.u32 %s8, 4
      %s382 = int_to_ptr.hbm [resolvable:$true] %s381
      %387 = dma.vmem_to_hbm [thread:$0]  %s380, 256, %s382, [#allocation4], 128, 128, 8
    $region57: #{tpu_custom_call.1} parent=1 // pred_fallthru
      _
    // Predicated region
    $region58: #{tpu_custom_call.1} parent=1 // pred_check
      _
    $region59: #{tpu_custom_call.1} parent=1 // pred_check_branch
      %389 = sbr.rel (0) target = $region61
    $region60: #{tpu_custom_call.1} parent=1 // pred_region
      %391 = dma.done [#allocation4], 256
    $region61: #{tpu_custom_call.1} parent=1 // pred_fallthru
      _
    %392 = vsyncpa [#allocation3], 1
    %393 = vsyncpa [#allocation6], 1
    %394 = vsyncpa [#allocation9], 1
    %395 = vsyncpa [#allocation4], 1

</llo_original>
